<compile_context>
chip_gen: v7x
topology: tpu7x:2x2x1
jax: 0.10.0
libtpu: 0.0.40
codegen_flags: <defaults>
</compile_context>

<pallas_src>
import functools

import jax
import jax.numpy as jnp
from jax.experimental import pallas as pl
from jax.experimental.pallas import tpu as pltpu


def _group_max_kernel(x_ref, o_ref, *, hw, groups):
    """x_ref: (RT, groups*hw) block, group-minor within each row (matches the
    contiguous PyTorch .view).  o_ref: (RT, hw).

    out[r, :] = max_g x[r, g*hw : (g+1)*hw], computed as an unrolled chain of
    elementwise maxima over static, contiguous lane slices.
    """
    acc = x_ref[:, 0:hw]
    for g in range(1, groups):
        acc = jnp.maximum(acc, x_ref[:, g * hw:(g + 1) * hw])
    o_ref[...] = acc


def _pick_row_tile(total_rows, groups, hw, itemsize):
    """Rows (of B*channel) per block: dtype-aware sublane multiple, ~4 MiB
    input block, divisor of total_rows when possible, >=2 blocks when possible."""
    sub = max(8, 32 // max(1, itemsize))  # f32 -> 8, bf16 -> 16, int8 -> 32
    if total_rows <= sub:
        return total_rows                 # single full block (always legal)

    target_block_bytes = 4 * 1024 * 1024  # fits double-buffered on v5e/v6e/v7x
    row_bytes = max(1, groups * hw * itemsize)
    max_rows = max(sub, ((target_block_bytes // row_bytes) // sub) * sub)

    # Keep at least 2 grid blocks when possible: on v7x the two TensorCores
    # must both stream to reach chip HBM bandwidth.
    half = max(sub, (((total_rows + 1) // 2) // sub) * sub)

    rt = max(sub, min(max_rows, half, total_rows))
    rt = max(sub, (rt // sub) * sub)

    # Prefer an RT that divides total_rows (no ragged last tile); otherwise
    # keep rt -- Pallas masks the ragged tail correctly.
    if total_rows % rt != 0:
        d = rt
        while d > sub and total_rows % d != 0:
            d -= sub
        if total_rows % d == 0:
            rt = d
    return rt


def vgg_adapter_forward(x, channel=64):
    """x: (B, cat, H, W) NCHW.  Returns (B, channel, H, W): max over each group
    of cat // channel consecutive input channels (== the PyTorch vgg_adapter)."""
    B, cat, H, W = x.shape
    assert cat % channel == 0, "cat must be a multiple of channel"
    G = cat // channel
    HW = H * W

    if G == 1:
        # Max over a singleton group is the identity.
        return x

    # Free, contiguous reshape: row = (b, out_channel), lanes = (g, h, w).
    rows = B * channel
    xf = x.reshape(rows, G * HW)

    itemsize = xf.dtype.itemsize
    RT = _pick_row_tile(rows, G, HW, itemsize)
    grid = (pl.cdiv(rows, RT),)

    in_block = RT * G * HW * itemsize
    out_block = RT * HW * itemsize
    # Double-buffered input + output blocks plus slack; stay under v7x's
    # 64 MiB physical VMEM per TensorCore (v5e/v6e have 128 MiB -> also fine).
    vmem_limit = int(min(max(32 * 1024 * 1024, 4 * (in_block + out_block)),
                         56 * 1024 * 1024))

    kernel = functools.partial(_group_max_kernel, hw=HW, groups=G)

    out = pl.pallas_call(
        kernel,
        out_shape=jax.ShapeDtypeStruct((rows, HW), x.dtype),
        grid=grid,
        in_specs=[pl.BlockSpec((RT, G * HW), lambda r: (r, 0))],
        out_specs=pl.BlockSpec((RT, HW), lambda r: (r, 0)),
        compiler_params=pltpu.CompilerParams(
            dimension_semantics=("parallel",),
            vmem_limit_bytes=vmem_limit,
        ),
        cost_estimate=pl.CostEstimate(
            flops=rows * (G - 1) * HW,
            transcendentals=0,
            bytes_accessed=(rows * G * HW + rows * HW) * itemsize,
        ),
    )(xf)

    return out.reshape(B, channel, H, W)


def _reference(x, channel):
    B, cat, H, W = x.shape
    G = cat // channel
    return jnp.max(x.reshape(B, channel, G, H, W), axis=2)


if __name__ == "__main__":
    key = jax.random.PRNGKey(0)

    # Test 1: small shapes (batch=2, channel=4, groups=2 -> cat=8, 16x16).
    B, channel, G, H, W = 2, 4, 2, 16, 16
    k1, k2, k3 = jax.random.split(key, 3)
    x1 = jax.random.normal(k1, (B, channel * G, H, W), dtype=jnp.float32)
    out1 = jax.block_until_ready(vgg_adapter_forward(x1, channel=channel))
    ref1 = _reference(x1, channel)
    assert out1.shape == (B, channel, H, W)
    assert jnp.allclose(out1, ref1), "mismatch vs reference (test 1)"

    # Test 2: exercises multiple grid blocks (rows=32 -> RT=16, grid=(2,)).
    B2, channel2, G2, H2, W2 = 2, 16, 4, 24, 24
    x2 = jax.random.normal(k2, (B2, channel2 * G2, H2, W2), dtype=jnp.float32)
    out2 = jax.block_until_ready(vgg_adapter_forward(x2, channel=channel2))
    ref2 = _reference(x2, channel2)
    assert out2.shape == (B2, channel2, H2, W2)
    assert jnp.allclose(out2, ref2), "mismatch vs reference (test 2)"

    # Test 3: HW not a multiple of 128 (7x7 -> HW=49) -> non-aligned lane
    # slices inside the kernel; output block still covers the full HW.
    B3, channel3, G3, H3, W3 = 1, 8, 2, 7, 7
    x3 = jax.random.normal(k3, (B3, channel3 * G3, H3, W3), dtype=jnp.float32)
    out3 = jax.block_until_ready(vgg_adapter_forward(x3, channel=channel3))
    ref3 = _reference(x3, channel3)
    assert out3.shape == (B3, channel3, H3, W3)
    assert jnp.allclose(out3, ref3), "mismatch vs reference (test 3)"

    print("KERNEL_OK")
</pallas_src>

<mosaic_0001>
module attributes {stable_mosaic.version = 11 : i64} {
  func.func @_group_max_kernel(%arg0: i32, %arg1: memref<8x512xf32, #tpu.memory_space<vmem>>, %arg2: memref<8x256xf32, #tpu.memory_space<vmem>>) attributes {dimension_semantics = [#tpu.dimension_semantics<parallel>], iteration_bounds = array<i64: 1>, scalar_prefetch = 0 : i64, scratch_operands = 0 : i64, tpu.core_type = #tpu.core_type<tc>, window_params = [{transform_indices = @transform_0, window_bounds = array<i64: 8, 512>}, {transform_indices = @transform_1, window_bounds = array<i64: 8, 256>}]} {
    %c0 = arith.constant 0 : index
    %c0_0 = arith.constant 0 : index
    %0 = vector.load %arg1[%c0, %c0_0] : memref<8x512xf32, #tpu.memory_space<vmem>>, vector<8x256xf32>
    %c0_1 = arith.constant 0 : index
    %c256 = arith.constant 256 : index
    %1 = vector.load %arg1[%c0_1, %c256] : memref<8x512xf32, #tpu.memory_space<vmem>>, vector<8x256xf32>
    %2 = arith.maximumf %0, %1 : vector<8x256xf32>
    %c0_2 = arith.constant 0 : index
    %c0_3 = arith.constant 0 : index
    %3 = vector.load %arg2[%c0_2, %c0_3] : memref<8x256xf32, #tpu.memory_space<vmem>>, vector<8x256xf32>
    tpu.vector_store %arg2[%c0_2, %c0_3], %2 {strides = array<i32>} : memref<8x256xf32, #tpu.memory_space<vmem>>, vector<8x256xf32>,
    return
  }
  func.func @transform_0(%arg0: i32) -> (i32, i32) {
    %c0_i32 = arith.constant 0 : i32
    %c0_i32_0 = arith.constant 0 : i32
    return %arg0, %c0_i32 : i32, i32
  }
  func.func @transform_1(%arg0: i32) -> (i32, i32) {
    %c0_i32 = arith.constant 0 : i32
    %c0_i32_0 = arith.constant 0 : i32
    return %arg0, %c0_i32 : i32, i32
  }
}

</mosaic_0001>

<llo_original>
// kernel: tpu_custom_call.1
$region0: #{tpu_custom_call.1}
  #allocation0 [shape = 'u32[]', space=smem, size = 0x4, offset = 0x4, fixed_abs, tag = 'smem constant byte address 0x4 - core index']
  #allocation1 [shape = 'u32[144,128]{1,0:T(1,128)}', space=vmem, size = 0x12000, scoped, tag = 'internal scratch']
  %s0 = inlined_call_operand.hbm [shape: f32[8,512], index: 0, kind: input, shape index: {}]
  %s1 = inlined_call_operand.hbm [shape: f32[8,256], index: 1, kind: output, shape index: {}]
  %s2 = sld [smem:[#allocation0]]
  $region18: #{tpu_custom_call.1} parent=0
    _
  %s4 = ssub.s32 1, %s2
  %s5 = scalar_select 0, %s4, %s2
  $region1: #{tpu_custom_call.1} parent=0
    #allocation2 [shape = 'u8[16384]{0}', space=vmem, size = 0x4000, scoped, tag = 'input window, operand 0, single buffered']
    #allocation3 [shape = 's32[1]{0}', space=sflag, size = 0x4, scoped, tag = 'scoped memory for tpu_custom_call.1']
    #allocation4 [shape = 's32[1]{0}', space=sflag, size = 0x4, scoped, tag = 'scoped memory for tpu_custom_call.1']
    #allocation5 [shape = 'u8[8192]{0}', space=vmem, size = 0x2000, scoped, tag = 'output window, operand 0, single buffered']
    %6 = vsyncpa [#allocation3], 0
    %7 = vsyncpa [#allocation4], 0
    // Predicated region
    $region2: #{tpu_custom_call.1} parent=1 // pred_check
      _
    $region3: #{tpu_custom_call.1} parent=1 // pred_check_branch
      %9 = sbr.rel (0) target = $region5
    $region4: #{tpu_custom_call.1} parent=1 // pred_region
      %s11 = ssub.s32 512, 512
      %12 = vsyncadd [#allocation3], %s11
      %s14 = sshll.u32 [#allocation2], 4
      %s15 = int_to_ptr.vmem [resolvable:$true] %s14
      %17 = dma.hbm_to_vmem [thread:$0]  %s0, 512, %s15, [#allocation3]
    $region5: #{tpu_custom_call.1} parent=1 // pred_fallthru
      _
    // Predicated region
    $region6: #{tpu_custom_call.1} parent=1 // pred_check
      _
    $region7: #{tpu_custom_call.1} parent=1 // pred_check_branch
      %19 = sbr.rel (0) target = $region9
    $region8: #{tpu_custom_call.1} parent=1 // pred_region
      %20 = dma.done [#allocation3], 512
    $region9: #{tpu_custom_call.1} parent=1 // pred_fallthru
      _
    %v21 = vld [vmem:[#allocation2] sm:$0xff]
    %v22 = vld [vmem:[#allocation2 + $0x8] sm:$0xff]
    %v23 = vld [vmem:[#allocation2 + $0x10] sm:$0xff]
    %v24 = vld [vmem:[#allocation2 + $0x18] sm:$0xff]
    %v25 = vmax.f32 %v21, %v23
    %v26 = vmax.f32 %v22, %v24
    %27 = vst [vmem:[#allocation5] sm:$0xff] %v25
    %28 = vst [vmem:[#allocation5 + $0x8] sm:$0xff] %v26
    // Predicated region
    $region10: #{tpu_custom_call.1} parent=1 // pred_check
      _
    $region11: #{tpu_custom_call.1} parent=1 // pred_check_branch
      %30 = sbr.rel (0) target = $region13
    $region12: #{tpu_custom_call.1} parent=1 // pred_region
      %s32 = ssub.s32 256, 256
      %33 = vsyncadd [#allocation4], %s32
      %s35 = sshll.u32 [#allocation5], 4
      %s36 = int_to_ptr.vmem [resolvable:$true] %s35
      %38 = dma.vmem_to_hbm [thread:$0]  %s36, 256, %s1, [#allocation4]
    $region13: #{tpu_custom_call.1} parent=1 // pred_fallthru
      _
    // Predicated region
    $region14: #{tpu_custom_call.1} parent=1 // pred_check
      _
    $region15: #{tpu_custom_call.1} parent=1 // pred_check_branch
      %40 = sbr.rel (0) target = $region17
    $region16: #{tpu_custom_call.1} parent=1 // pred_region
      %41 = dma.done [#allocation4], 256
    $region17: #{tpu_custom_call.1} parent=1 // pred_fallthru
      _
    %42 = vsyncpa [#allocation3], 1
    %43 = vsyncpa [#allocation4], 1

</llo_original>
